<compile_context>
chip_gen: v6e
topology: v6e:2x2x1
jax: 0.10.0
libtpu: 0.0.40
codegen_flags: <defaults>
</compile_context>

<pallas_src>
import math
import functools

import jax
import jax.numpy as jnp
from jax.experimental import pallas as pl
from jax.experimental.pallas import tpu as pltpu


NEG = -1e30  # pushes padded atom slots to ~ -inf before the softmax


def _round_up(n, m):
    return ((n + m - 1) // m) * m


# ---------------------------------------------------------------------------
# Kernel: fused forward for one batch tile.
#   x:      (BT, in_dim)                  f32
#   wf:     (in_dim, 128)                 bf16   feature layer
#   bf:     (1, 128)                      f32
#   wh:     (128, 256)                    bf16   [adv_hidden | val_hidden] fused
#   bh:     (1, 256)                      f32
#   wo:     (256, (A+1)*128)              bf16   block-diag [adv_head ; val_head], lane-padded
#   bo:     (1, (A+1)*128)                f32    (padded value-bias slots = -1e30)
#   sup:    (1, 128)                      f32    support padded with zeros
#   q:      (BT, A)                       f32
# ---------------------------------------------------------------------------
def dueling_kernel(x_ref, wf_ref, bf_ref, wh_ref, bh_ref, wo_ref, bo_ref, sup_ref,
                   q_ref, *, out_dim, atom_pad):
    x = x_ref[...]                                                     # (BT, in_dim) f32

    # feature = ReLU(x @ Wf + bf)
    wf = wf_ref[...].astype(jnp.float32)
    feat = jnp.dot(x, wf, preferred_element_type=jnp.float32) + bf_ref[...]
    feat = jnp.maximum(feat, 0.0)                                      # (BT, 128)

    # both hidden layers in one 256-wide matmul, then ReLU
    wh = wh_ref[...].astype(jnp.float32)
    hid = jnp.dot(feat, wh, preferred_element_type=jnp.float32) + bh_ref[...]
    hid = jnp.maximum(hid, 0.0)                                        # (BT, 256)

    # both output heads in one block-diagonal matmul (K=256 fills the MXU)
    wo = wo_ref[...].astype(jnp.float32)
    out = jnp.dot(hid, wo, preferred_element_type=jnp.float32) + bo_ref[...]
    # out: (BT, (A+1)*128) — per-action 128-lane atom blocks, value block last.

    bt = x.shape[0]
    adv = out[:, : out_dim * atom_pad].reshape(bt, out_dim, atom_pad)  # (BT, A, 128)
    val = out[:, out_dim * atom_pad:]                                  # (BT, 128)

    # dueling combine (padded atom slots: adv = 0, val = -1e30 -> q_atoms ~ -inf)
    q_atoms = val[:, None, :] + adv - jnp.mean(adv, axis=1, keepdims=True)

    # softmax over atoms (full 128-lane vregs), clamp(min=0.001)
    m = jnp.max(q_atoms, axis=-1, keepdims=True)
    e = jnp.exp(q_atoms - m)
    denom = jnp.sum(e, axis=-1, keepdims=True)
    dist = e * pl.reciprocal(denom, approx=True)
    dist = jnp.maximum(dist, 0.001)

    # q = sum_z dist * support   (padded slots have support = 0)
    sup = sup_ref[...][None, :, :]                                     # (1, 1, 128)
    q = jnp.sum(dist * sup, axis=-1)                                   # (BT, A)
    q_ref[...] = q.astype(q_ref.dtype)


# ---------------------------------------------------------------------------
# Parameter packing: torch-layout Linear params -> fused, lane-padded, bf16 weights.
# ---------------------------------------------------------------------------
def pack_params(raw, support, out_dim, atom_size, weight_dtype=jnp.bfloat16):
    (wf, bf_, wah, bah, wvh, bvh, wa, ba, wv, bv) = raw
    hidden = wf.shape[0]                     # 128
    atom_pad = _round_up(atom_size, 128)
    pad = atom_pad - atom_size

    # feature layer (pre-transposed to (in, out))
    wf_k = wf.T
    bf_k = bf_.reshape(1, hidden)

    # fused hidden layers: [adv_hidden | val_hidden]
    w_hid = jnp.concatenate([wah.T, wvh.T], axis=1)                    # (128, 256)
    b_hid = jnp.concatenate([bah, bvh]).reshape(1, 2 * hidden)

    # fused, lane-padded output heads (block-diagonal over the 256-wide hidden)
    wa_t = wa.T.reshape(hidden, out_dim, atom_size)
    wa_p = jnp.pad(wa_t, ((0, 0), (0, 0), (0, pad))).reshape(hidden, out_dim * atom_pad)
    wv_p = jnp.pad(wv.T, ((0, 0), (0, pad)))                           # (128, atom_pad)
    w_out = jnp.concatenate(
        [jnp.concatenate([wa_p, jnp.zeros((hidden, atom_pad), jnp.float32)], axis=1),
         jnp.concatenate([jnp.zeros((hidden, out_dim * atom_pad), jnp.float32), wv_p], axis=1)],
        axis=0)                                                        # (256, (A+1)*atom_pad)

    ba_p = jnp.pad(ba.reshape(out_dim, atom_size), ((0, 0), (0, pad))).reshape(out_dim * atom_pad)
    bv_p = jnp.pad(bv, (0, pad), constant_values=NEG)                  # padded value bias -> -inf
    b_out = jnp.concatenate([ba_p, bv_p]).reshape(1, (out_dim + 1) * atom_pad)

    sup_p = jnp.pad(support.astype(jnp.float32), (0, pad)).reshape(1, atom_pad)

    return (wf_k.astype(weight_dtype), bf_k.astype(jnp.float32),
            w_hid.astype(weight_dtype), b_hid.astype(jnp.float32),
            w_out.astype(weight_dtype), b_out.astype(jnp.float32),
            sup_p)


# ---------------------------------------------------------------------------
# Wrapper: pads batch to 8-sublane multiples, tiles the batch on a parallel grid,
# keeps all weights VMEM-resident (constant index_map), slices the result back.
# ---------------------------------------------------------------------------
def dueling_forward(x, packed, *, out_dim, atom_size):
    B, in_dim = x.shape
    atom_pad = _round_up(atom_size, 128)
    n_cols = (out_dim + 1) * atom_pad

    B_pad = _round_up(max(B, 1), 8)
    BT = min(B_pad, 512)                       # batch tile (rows per grid step)
    n_blocks = pl.cdiv(B_pad, BT)
    B_pad = n_blocks * BT
    x_p = jnp.pad(x, ((0, B_pad - B), (0, 0))) if B_pad != B else x

    wf, bf_, wh, bh, wo, bo, sup = packed
    kernel = functools.partial(dueling_kernel, out_dim=out_dim, atom_pad=atom_pad)

    ce = pl.CostEstimate(
        flops=2 * B_pad * (in_dim * 128 + 128 * 256 + 256 * n_cols),
        transcendentals=B_pad * out_dim * (atom_pad + 1),
        bytes_accessed=(x_p.size * 4 + wf.size * 2 + wh.size * 2 + wo.size * 2
                        + bf_.size * 4 + bh.size * 4 + bo.size * 4 + sup.size * 4
                        + B_pad * out_dim * 4))

    q = pl.pallas_call(
        kernel,
        out_shape=jax.ShapeDtypeStruct((B_pad, out_dim), jnp.float32),
        grid=(n_blocks,),
        in_specs=[
            pl.BlockSpec((BT, in_dim), lambda i: (i, 0)),      # x: tiled over batch
            pl.BlockSpec((in_dim, 128), lambda i: (0, 0)),     # weights: resident
            pl.BlockSpec((1, 128), lambda i: (0, 0)),
            pl.BlockSpec((128, 256), lambda i: (0, 0)),
            pl.BlockSpec((1, 256), lambda i: (0, 0)),
            pl.BlockSpec((256, n_cols), lambda i: (0, 0)),
            pl.BlockSpec((1, n_cols), lambda i: (0, 0)),
            pl.BlockSpec((1, atom_pad), lambda i: (0, 0)),
        ],
        out_specs=pl.BlockSpec((BT, out_dim), lambda i: (i, 0)),
        compiler_params=pltpu.CompilerParams(dimension_semantics=("parallel",)),
        cost_estimate=ce,
    )(x_p, wf, bf_, wh, bh, wo, bo, sup)
    return q[:B]


# ---------------------------------------------------------------------------
# Deterministic parameter construction (matches nn.Linear default init shapes).
# ---------------------------------------------------------------------------
def _make_linear(key, in_f, out_f):
    kw, kb = jax.random.split(key)
    r = 1.0 / math.sqrt(in_f)
    w = jax.random.uniform(kw, (out_f, in_f), jnp.float32, -r, r)   # torch layout (out, in)
    b = jax.random.uniform(kb, (out_f,), jnp.float32, -r, r)
    return w, b


if __name__ == "__main__":
    # Small, module-consistent shapes.
    B, in_dim, out_dim, atom_size = 4, 16, 4, 51
    hidden = 128

    root = jax.random.PRNGKey(0)
    k_x, k_f, k_ah, k_a, k_vh, k_v = jax.random.split(root, 6)

    x = jax.random.normal(k_x, (B, in_dim), dtype=jnp.float32)
    support = jnp.linspace(0.0, 200.0, atom_size, dtype=jnp.float32)

    wf, bf_ = _make_linear(k_f, in_dim, hidden)
    wah, bah = _make_linear(k_ah, hidden, hidden)
    wa, ba = _make_linear(k_a, hidden, out_dim * atom_size)
    wvh, bvh = _make_linear(k_vh, hidden, hidden)
    wv, bv = _make_linear(k_v, hidden, atom_size)
    raw = (wf, bf_, wah, bah, wvh, bvh, wa, ba, wv, bv)

    packed = pack_params(raw, support, out_dim, atom_size)
    q = dueling_forward(x, packed, out_dim=out_dim, atom_size=atom_size)
    q = jax.block_until_ready(q)

    # Pure-JAX reference (same bf16-rounded weights as the kernel uses).
    r32 = lambda w: w.astype(jnp.bfloat16).astype(jnp.float32)
    feat = jnp.maximum(x @ r32(wf).T + bf_, 0.0)
    adv_h = jnp.maximum(feat @ r32(wah).T + bah, 0.0)
    val_h = jnp.maximum(feat @ r32(wvh).T + bvh, 0.0)
    adv = (adv_h @ r32(wa).T + ba).reshape(B, out_dim, atom_size)
    val = (val_h @ r32(wv).T + bv).reshape(B, 1, atom_size)
    q_atoms = val + adv - adv.mean(axis=1, keepdims=True)
    dist = jax.nn.softmax(q_atoms, axis=-1)
    dist = jnp.clip(dist, 0.001, None)
    q_ref = jnp.sum(dist * support, axis=2)

    assert q.shape == (B, out_dim)
    # rtol covers the approx-reciprocal (EUP) softmax normalization path.
    assert jnp.allclose(q, q_ref, rtol=5e-3, atol=1e-3), (q, q_ref)

    print("KERNEL_OK")
</pallas_src>

<mosaic_0001>
module attributes {stable_mosaic.version = 11 : i64} {
  func.func @dueling_kernel(%arg0: i32, %arg1: memref<8x16xf32, #tpu.memory_space<vmem>>, %arg2: memref<16x128xbf16, #tpu.memory_space<vmem>>, %arg3: memref<1x128xf32, #tpu.memory_space<vmem>>, %arg4: memref<128x256xbf16, #tpu.memory_space<vmem>>, %arg5: memref<1x256xf32, #tpu.memory_space<vmem>>, %arg6: memref<256x640xbf16, #tpu.memory_space<vmem>>, %arg7: memref<1x640xf32, #tpu.memory_space<vmem>>, %arg8: memref<1x128xf32, #tpu.memory_space<vmem>>, %arg9: memref<8x4xf32, #tpu.memory_space<vmem>>) attributes {dimension_semantics = [#tpu.dimension_semantics<parallel>], iteration_bounds = array<i64: 1>, scalar_prefetch = 0 : i64, scratch_operands = 0 : i64, tpu.core_type = #tpu.core_type<tc>, window_params = [{transform_indices = @transform_0, window_bounds = array<i64: 8, 16>}, {pipeline_mode = #tpu.pipeline_mode<synchronous>, transform_indices = @transform_1, window_bounds = array<i64: 16, 128>}, {pipeline_mode = #tpu.pipeline_mode<synchronous>, transform_indices = @transform_2, window_bounds = array<i64: 1, 128>}, {pipeline_mode = #tpu.pipeline_mode<synchronous>, transform_indices = @transform_3, window_bounds = array<i64: 128, 256>}, {pipeline_mode = #tpu.pipeline_mode<synchronous>, transform_indices = @transform_4, window_bounds = array<i64: 1, 256>}, {pipeline_mode = #tpu.pipeline_mode<synchronous>, transform_indices = @transform_5, window_bounds = array<i64: 256, 640>}, {pipeline_mode = #tpu.pipeline_mode<synchronous>, transform_indices = @transform_6, window_bounds = array<i64: 1, 640>}, {pipeline_mode = #tpu.pipeline_mode<synchronous>, transform_indices = @transform_7, window_bounds = array<i64: 1, 128>}, {transform_indices = @transform_8, window_bounds = array<i64: 8, 4>}]} {
    %c0 = arith.constant 0 : index
    %c0_0 = arith.constant 0 : index
    %0 = vector.load %arg1[%c0, %c0_0] : memref<8x16xf32, #tpu.memory_space<vmem>>, vector<8x16xf32>
    %c0_1 = arith.constant 0 : index
    %c0_2 = arith.constant 0 : index
    %1 = vector.load %arg2[%c0_1, %c0_2] : memref<16x128xbf16, #tpu.memory_space<vmem>>, vector<16x128xbf16>
    %2 = arith.extf %1 : vector<16x128xbf16> to vector<16x128xf32>
    %cst = arith.constant dense<0.000000e+00> : vector<8x128xf32>
    %3 = tpu.matmul %0, %2, %cst {dimension_numbers = #tpu.dot_dimension_numbers<[1], [0], [0], [1], [0, 0, 1, 1], [], []>} : vector<8x16xf32>, vector<16x128xf32>, vector<8x128xf32> -> vector<8x128xf32>
    %c0_3 = arith.constant 0 : index
    %c0_4 = arith.constant 0 : index
    %4 = vector.load %arg3[%c0_3, %c0_4] : memref<1x128xf32, #tpu.memory_space<vmem>>, vector<1x128xf32>
    %5 = vector.broadcast %4 : vector<1x128xf32> to vector<8x128xf32>
    %6 = arith.addf %3, %5 : vector<8x128xf32>
    %cst_5 = arith.constant 0.000000e+00 : f32
    %7 = vector.broadcast %cst_5 : f32 to vector<8x128xf32>
    %8 = arith.maximumf %6, %7 : vector<8x128xf32>
    %c0_6 = arith.constant 0 : index
    %c0_7 = arith.constant 0 : index
    %9 = vector.load %arg4[%c0_6, %c0_7] : memref<128x256xbf16, #tpu.memory_space<vmem>>, vector<128x256xbf16>
    %10 = arith.extf %9 : vector<128x256xbf16> to vector<128x256xf32>
    %cst_8 = arith.constant dense<0.000000e+00> : vector<8x256xf32>
    %11 = tpu.matmul %8, %10, %cst_8 {dimension_numbers = #tpu.dot_dimension_numbers<[1], [0], [0], [1], [0, 0, 1, 1], [], []>} : vector<8x128xf32>, vector<128x256xf32>, vector<8x256xf32> -> vector<8x256xf32>
    %c0_9 = arith.constant 0 : index
    %c0_10 = arith.constant 0 : index
    %12 = vector.load %arg5[%c0_9, %c0_10] : memref<1x256xf32, #tpu.memory_space<vmem>>, vector<1x256xf32>
    %13 = vector.broadcast %12 : vector<1x256xf32> to vector<8x256xf32>
    %14 = arith.addf %11, %13 : vector<8x256xf32>
    %cst_11 = arith.constant 0.000000e+00 : f32
    %15 = vector.broadcast %cst_11 : f32 to vector<8x256xf32>
    %16 = arith.maximumf %14, %15 : vector<8x256xf32>
    %c0_12 = arith.constant 0 : index
    %c0_13 = arith.constant 0 : index
    %17 = vector.load %arg6[%c0_12, %c0_13] : memref<256x640xbf16, #tpu.memory_space<vmem>>, vector<256x640xbf16>
    %18 = arith.extf %17 : vector<256x640xbf16> to vector<256x640xf32>
    %cst_14 = arith.constant dense<0.000000e+00> : vector<8x640xf32>
    %19 = tpu.matmul %16, %18, %cst_14 {dimension_numbers = #tpu.dot_dimension_numbers<[1], [0], [0], [1], [0, 0, 1, 1], [], []>} : vector<8x256xf32>, vector<256x640xf32>, vector<8x640xf32> -> vector<8x640xf32>
    %c0_15 = arith.constant 0 : index
    %c0_16 = arith.constant 0 : index
    %20 = vector.load %arg7[%c0_15, %c0_16] : memref<1x640xf32, #tpu.memory_space<vmem>>, vector<1x640xf32>
    %21 = vector.broadcast %20 : vector<1x640xf32> to vector<8x640xf32>
    %22 = arith.addf %19, %21 : vector<8x640xf32>
    %23 = vector.extract_strided_slice %22 {offsets = [0, 0], sizes = [8, 512], strides = [1, 1]} : vector<8x640xf32> to vector<8x512xf32>
    %24 = vector.shape_cast %23 : vector<8x512xf32> to vector<8x4x128xf32>
    %25 = vector.extract_strided_slice %22 {offsets = [0, 512], sizes = [8, 128], strides = [1, 1]} : vector<8x640xf32> to vector<8x128xf32>
    %26 = vector.shape_cast %25 : vector<8x128xf32> to vector<8x1x128xf32>
    %27 = vector.broadcast %26 : vector<8x1x128xf32> to vector<8x4x128xf32>
    %28 = arith.addf %27, %24 : vector<8x4x128xf32>
    %cst_17 = arith.constant dense<0.000000e+00> : vector<8x128xf32>
    %29 = vector.multi_reduction <add>, %24, %cst_17 [1] : vector<8x4x128xf32> to vector<8x128xf32>
    %30 = vector.shape_cast %29 : vector<8x128xf32> to vector<8x1x128xf32>
    %cst_18 = arith.constant 4.000000e+00 : f32
    %31 = vector.broadcast %cst_18 : f32 to vector<8x1x128xf32>
    %32 = arith.divf %30, %31 : vector<8x1x128xf32>
    %33 = vector.broadcast %32 : vector<8x1x128xf32> to vector<8x4x128xf32>
    %34 = arith.subf %28, %33 : vector<8x4x128xf32>
    %cst_19 = arith.constant dense<0xFF800000> : vector<8x4xf32>
    %35 = vector.multi_reduction <maximumf>, %34, %cst_19 [2] : vector<8x4x128xf32> to vector<8x4xf32>
    %36 = vector.shape_cast %35 : vector<8x4xf32> to vector<8x4x1xf32>
    %37 = vector.broadcast %36 : vector<8x4x1xf32> to vector<8x4x128xf32>
    %38 = arith.subf %34, %37 : vector<8x4x128xf32>
    %39 = math.exp %38 : vector<8x4x128xf32>
    %cst_20 = arith.constant dense<0.000000e+00> : vector<8x4xf32>
    %40 = vector.multi_reduction <add>, %39, %cst_20 [2] : vector<8x4x128xf32> to vector<8x4xf32>
    %41 = vector.shape_cast %40 : vector<8x4xf32> to vector<8x4x1xf32>
    %42 = tpu.reciprocal %41 {approx = true} : vector<8x4x1xf32> -> vector<8x4x1xf32>
    %43 = vector.broadcast %42 : vector<8x4x1xf32> to vector<8x4x128xf32>
    %44 = arith.mulf %39, %43 : vector<8x4x128xf32>
    %cst_21 = arith.constant 1.000000e-03 : f32
    %45 = vector.broadcast %cst_21 : f32 to vector<8x4x128xf32>
    %46 = arith.maximumf %44, %45 : vector<8x4x128xf32>
    %c0_22 = arith.constant 0 : index
    %c0_23 = arith.constant 0 : index
    %47 = vector.load %arg8[%c0_22, %c0_23] : memref<1x128xf32, #tpu.memory_space<vmem>>, vector<1x128xf32>
    %48 = vector.shape_cast %47 : vector<1x128xf32> to vector<1x1x128xf32>
    %49 = vector.broadcast %48 : vector<1x1x128xf32> to vector<8x4x128xf32>
    %50 = arith.mulf %46, %49 : vector<8x4x128xf32>
    %cst_24 = arith.constant dense<0.000000e+00> : vector<8x4xf32>
    %51 = vector.multi_reduction <add>, %50, %cst_24 [2] : vector<8x4x128xf32> to vector<8x4xf32>
    %c0_25 = arith.constant 0 : index
    %c0_26 = arith.constant 0 : index
    %52 = vector.load %arg9[%c0_25, %c0_26] : memref<8x4xf32, #tpu.memory_space<vmem>>, vector<8x4xf32>
    tpu.vector_store %arg9[%c0_25, %c0_26], %51 {strides = array<i32>} : memref<8x4xf32, #tpu.memory_space<vmem>>, vector<8x4xf32>,
    return
  }
  func.func @transform_0(%arg0: i32) -> (i32, i32) {
    %c0_i32 = arith.constant 0 : i32
    %c0_i32_0 = arith.constant 0 : i32
    return %arg0, %c0_i32 : i32, i32
  }
  func.func @transform_1(%arg0: i32) -> (i32, i32) {
    %c0_i32 = arith.constant 0 : i32
    %c0_i32_0 = arith.constant 0 : i32
    %c0_i32_1 = arith.constant 0 : i32
    return %c0_i32, %c0_i32_0 : i32, i32
  }
  func.func @transform_2(%arg0: i32) -> (i32, i32) {
    %c0_i32 = arith.constant 0 : i32
    %c0_i32_0 = arith.constant 0 : i32
    %c0_i32_1 = arith.constant 0 : i32
    return %c0_i32, %c0_i32_0 : i32, i32
  }
  func.func @transform_3(%arg0: i32) -> (i32, i32) {
    %c0_i32 = arith.constant 0 : i32
    %c0_i32_0 = arith.constant 0 : i32
    %c0_i32_1 = arith.constant 0 : i32
    return %c0_i32, %c0_i32_0 : i32, i32
  }
  func.func @transform_4(%arg0: i32) -> (i32, i32) {
    %c0_i32 = arith.constant 0 : i32
    %c0_i32_0 = arith.constant 0 : i32
    %c0_i32_1 = arith.constant 0 : i32
    return %c0_i32, %c0_i32_0 : i32, i32
  }
  func.func @transform_5(%arg0: i32) -> (i32, i32) {
    %c0_i32 = arith.constant 0 : i32
    %c0_i32_0 = arith.constant 0 : i32
    %c0_i32_1 = arith.constant 0 : i32
    return %c0_i32, %c0_i32_0 : i32, i32
  }
  func.func @transform_6(%arg0: i32) -> (i32, i32) {
    %c0_i32 = arith.constant 0 : i32
    %c0_i32_0 = arith.constant 0 : i32
    %c0_i32_1 = arith.constant 0 : i32
    return %c0_i32, %c0_i32_0 : i32, i32
  }
  func.func @transform_7(%arg0: i32) -> (i32, i32) {
    %c0_i32 = arith.constant 0 : i32
    %c0_i32_0 = arith.constant 0 : i32
    %c0_i32_1 = arith.constant 0 : i32
    return %c0_i32, %c0_i32_0 : i32, i32
  }
  func.func @transform_8(%arg0: i32) -> (i32, i32) {
    %c0_i32 = arith.constant 0 : i32
    %c0_i32_0 = arith.constant 0 : i32
    return %arg0, %c0_i32 : i32, i32
  }
}

</mosaic_0001>

<llo_original>
// kernel: tpu_custom_call.1
$region0: #{tpu_custom_call.1}
  #allocation0 [shape = 'u32[]', space=smem, size = 0x4, offset = 0x4, fixed_abs, tag = 'smem constant byte address 0x4 - core index']
  #allocation1 [shape = 'u32[144,128]{1,0:T(1,128)}', space=vmem, size = 0x12000, scoped, tag = 'internal scratch']
  %s0 = inlined_call_operand.hbm [shape: f32[8,16], index: 0, kind: input, shape index: {}]
  %s1 = inlined_call_operand.hbm [shape: bf16[16,128], index: 1, kind: input, shape index: {}]
  %s2 = inlined_call_operand.vmem [shape: f32[1,128], index: 2, kind: input, shape index: {}]
  %s3 = inlined_call_operand.hbm [shape: bf16[128,256], index: 3, kind: input, shape index: {}]
  %s4 = inlined_call_operand.vmem [shape: f32[1,256], index: 4, kind: input, shape index: {}]
  %s5 = inlined_call_operand.hbm [shape: bf16[256,640], index: 5, kind: input, shape index: {}]
  %s6 = inlined_call_operand.vmem [shape: f32[1,640], index: 6, kind: input, shape index: {}]
  %s7 = inlined_call_operand.vmem [shape: f32[1,128], index: 7, kind: input, shape index: {}]
  %s8 = inlined_call_operand.vmem [shape: f32[8,4], index: 8, kind: output, shape index: {}]
  %s9 = sld [smem:[#allocation0]]
  $region58: #{tpu_custom_call.1} parent=0
    _
  %s11 = ssub.s32 1, %s9
  %s12 = scalar_select 0, %s11, %s9
  $region1: #{tpu_custom_call.1} parent=0
    #allocation2 [shape = 'u8[4096]{0}', space=vmem, size = 0x1000, scoped, tag = 'input window, operand 0, single buffered']
    #allocation3 [shape = 's32[1]{0}', space=sflag, size = 0x4, scoped, tag = 'scoped memory for tpu_custom_call.1']
    #allocation4 [shape = 'u8[4096]{0}', space=vmem, size = 0x1000, scoped, tag = 'input window, operand 1, single buffered']
    #allocation5 [shape = 's32[1]{0}', space=sflag, size = 0x4, scoped, tag = 'scoped memory for tpu_custom_call.1']
    #allocation6 [shape = 'u8[65536]{0}', space=vmem, size = 0x10000, scoped, tag = 'input window, operand 3, single buffered']
    #allocation7 [shape = 'u8[327680]{0}', space=vmem, size = 0x50000, scoped, tag = 'input window, operand 5, single buffered']
    #allocation8 [shape = 's32[1]{0}', space=sflag, size = 0x4, scoped, tag = 'scoped memory for tpu_custom_call.1']
    %13 = vsyncpa [#allocation3], 0
    %14 = vsyncpa [#allocation5], 0
    %15 = vsyncpa [#allocation8], 0
    // Predicated region
    $region2: #{tpu_custom_call.1} parent=1 // pred_check
      _
    $region3: #{tpu_custom_call.1} parent=1 // pred_check_branch
      %17 = sbr.rel (0) target = $region5
    $region4: #{tpu_custom_call.1} parent=1 // pred_region
      %s19 = ssub.s32 128, 128
      %20 = vsyncadd [#allocation3], %s19
      %s22 = sshll.u32 [#allocation2], 4
      %s23 = int_to_ptr.vmem [resolvable:$true] %s22
      %25 = dma.hbm_to_vmem [thread:$0]  %s0, 128, %s23, [#allocation3]
    $region5: #{tpu_custom_call.1} parent=1 // pred_fallthru
      _
    // Predicated region
    $region6: #{tpu_custom_call.1} parent=1 // pred_check
      _
    $region7: #{tpu_custom_call.1} parent=1 // pred_check_branch
      %27 = sbr.rel (0) target = $region9
    $region8: #{tpu_custom_call.1} parent=1 // pred_region
      %s29 = ssub.s32 128, 128
      %30 = vsyncadd [#allocation5], %s29
      %s31 = sshll.u32 [#allocation4], 4
      %s32 = int_to_ptr.vmem [resolvable:$true] %s31
      %37 = dma.hbm_to_vmem [thread:$0]  %s1, 128, %s32, [#allocation5], 64, 64, 4
    $region9: #{tpu_custom_call.1} parent=1 // pred_fallthru
      _
    // Predicated region
    $region10: #{tpu_custom_call.1} parent=1 // pred_check
      _
    $region11: #{tpu_custom_call.1} parent=1 // pred_check_branch
      %39 = sbr.rel (0) target = $region13
    $region12: #{tpu_custom_call.1} parent=1 // pred_region
      _
    $region13: #{tpu_custom_call.1} parent=1 // pred_fallthru
      _
    // Predicated region
    $region14: #{tpu_custom_call.1} parent=1 // pred_check
      _
    $region15: #{tpu_custom_call.1} parent=1 // pred_check_branch
      %41 = sbr.rel (0) target = $region17
    $region16: #{tpu_custom_call.1} parent=1 // pred_region
      %s43 = ssub.s32 2048, 2048
      %44 = vsyncadd [#allocation5], %s43
      %s45 = sshll.u32 [#allocation6], 4
      %s46 = int_to_ptr.vmem [resolvable:$true] %s45
      %51 = dma.hbm_to_vmem [thread:$0]  %s3, 2048, %s46, [#allocation5], 128, 128, 8
    $region17: #{tpu_custom_call.1} parent=1 // pred_fallthru
      _
    // Predicated region
    $region18: #{tpu_custom_call.1} parent=1 // pred_check
      _
    $region19: #{tpu_custom_call.1} parent=1 // pred_check_branch
      %53 = sbr.rel (0) target = $region21
    $region20: #{tpu_custom_call.1} parent=1 // pred_region
      _
    $region21: #{tpu_custom_call.1} parent=1 // pred_fallthru
      _
    // Predicated region
    $region22: #{tpu_custom_call.1} parent=1 // pred_check
      _
    $region23: #{tpu_custom_call.1} parent=1 // pred_check_branch
      %55 = sbr.rel (0) target = $region25
    $region24: #{tpu_custom_call.1} parent=1 // pred_region
      %s57 = ssub.s32 10240, 10240
      %58 = vsyncadd [#allocation8], %s57
      %s59 = sshll.u32 [#allocation7], 4
      %s60 = int_to_ptr.vmem [resolvable:$true] %s59
      %65 = dma.hbm_to_vmem [thread:$0]  %s5, 10240, %s60, [#allocation8], 320, 320, 20
    $region25: #{tpu_custom_call.1} parent=1 // pred_fallthru
      _
    // Predicated region
    $region26: #{tpu_custom_call.1} parent=1 // pred_check
      _
    $region27: #{tpu_custom_call.1} parent=1 // pred_check_branch
      %67 = sbr.rel (0) target = $region29
    $region28: #{tpu_custom_call.1} parent=1 // pred_region
      _
    $region29: #{tpu_custom_call.1} parent=1 // pred_fallthru
      _
    // Predicated region
    $region30: #{tpu_custom_call.1} parent=1 // pred_check
      _
    $region31: #{tpu_custom_call.1} parent=1 // pred_check_branch
      %69 = sbr.rel (0) target = $region33
    $region32: #{tpu_custom_call.1} parent=1 // pred_region
      _
    $region33: #{tpu_custom_call.1} parent=1 // pred_fallthru
      _
    // Predicated region
    $region34: #{tpu_custom_call.1} parent=1 // pred_check
      _
    $region35: #{tpu_custom_call.1} parent=1 // pred_check_branch
      %71 = sbr.rel (0) target = $region37
    $region36: #{tpu_custom_call.1} parent=1 // pred_region
      %72 = dma.done [#allocation3], 128
    $region37: #{tpu_custom_call.1} parent=1 // pred_fallthru
      _
    // Predicated region
    $region38: #{tpu_custom_call.1} parent=1 // pred_check
      _
    $region39: #{tpu_custom_call.1} parent=1 // pred_check_branch
      %74 = sbr.rel (0) target = $region41
    $region40: #{tpu_custom_call.1} parent=1 // pred_region
      %75 = dma.done [#allocation5], 128
    $region41: #{tpu_custom_call.1} parent=1 // pred_fallthru
      _
    // Predicated region
    $region42: #{tpu_custom_call.1} parent=1 // pred_check
      _
    $region43: #{tpu_custom_call.1} parent=1 // pred_check_branch
      %77 = sbr.rel (0) target = $region45
    $region44: #{tpu_custom_call.1} parent=1 // pred_region
      %78 = dma.done [#allocation5], 2048
    $region45: #{tpu_custom_call.1} parent=1 // pred_fallthru
      _
    // Predicated region
    $region46: #{tpu_custom_call.1} parent=1 // pred_check
      _
    $region47: #{tpu_custom_call.1} parent=1 // pred_check_branch
      %80 = sbr.rel (0) target = $region49
    $region48: #{tpu_custom_call.1} parent=1 // pred_region
      %81 = dma.done [#allocation8], 10240
    $region49: #{tpu_custom_call.1} parent=1 // pred_fallthru
      _
    %v82 = vld [vmem:[#allocation2] sm:$0xff]
    %v83 = vld [vmem:[#allocation4] sm:$0xf]
    %v84 = vld [vmem:[#allocation4 + $0x4] sm:$0xf]
    %v85 = vunpack.c.l.bf16 %v83
    %v86 = vunpack.c.l.bf16 %v84
    %v87 = vld [vmem:[%s2] sm:$0x1]
    %v89 = vlaneseq
    %v90 = vshrl.u32 %v89, 7
    %v91 = vsub.s32 0, %v90
    %v92 = vrot.slane %v87, %v91
    %vm94 = vcmask 130048
    %v96 = vsel %vm94, %v82, 0
    %98 = vmatprep.subr.mxu0 0.0
    %99 = vmatpush1.msra.mxu0 0.0
    %100 = vmatprep.subr.mxu0 0.0
    %101 = vmatpush1.msra.mxu0 0.0
    %102 = vmatprep.subr.mxu0 0.0
    %103 = vmatpush1.msra.mxu0 0.0
    %104 = vmatprep.subr.mxu0 0.0
    %105 = vmatpush1.msra.mxu0 0.0
    %106 = vmatprep.subr.mxu0 0.0
    %107 = vmatpush1.msra.mxu0 0.0
    %108 = vmatprep.subr.mxu0 0.0
    %109 = vmatpush1.msra.mxu0 0.0
    %110 = vmatprep.subr.mxu0 0.0
    %111 = vmatpush1.msra.mxu0 0.0
    %112 = vmatprep.subr.mxu0 0.0
    %113 = vmatpush1.msra.mxu0 0.0
    %114 = vmatprep.subr.mxu0 0.0
    %115 = vmatpush1.msra.mxu0 0.0
    %116 = vmatprep.subr.mxu0 0.0
    %117 = vmatpush1.msra.mxu0 0.0
    %118 = vmatprep.subr.mxu0 0.0
    %119 = vmatpush1.msra.mxu0 0.0
    %120 = vmatprep.subr.mxu0 0.0
    %121 = vmatpush1.msra.mxu0 0.0
    %122 = vmatprep.subr.mxu0 0.0
    %123 = vmatpush1.msra.mxu0 0.0
    %124 = vmatprep.subr.mxu0 0.0
    %125 = vmatpush1.msra.mxu0 0.0
    %126 = vmatprep.subr.mxu0 0.0
    %127 = vmatpush1.msra.mxu0 %v86
    %128 = vmatprep.subr.mxu0 0.0
    %129 = vmatpush1.msra.mxu0 %v85
    %130 = vmatprep.subr.mxu0 0.0
    %131 = vmatpush2.msra.mxu0 0.0
    %132 = vmatprep.subr.mxu0 0.0
    %133 = vmatpush2.msra.mxu0 0.0
    %134 = vmatprep.subr.mxu0 0.0
    %135 = vmatpush2.msra.mxu0 0.0
    %136 = vmatprep.subr.mxu0 0.0
    %137 = vmatpush2.msra.mxu0 0.0
    %138 = vmatprep.subr.mxu0 0.0
    %139 = vmatpush2.msra.mxu0 0.0
    %140 = vmatprep.subr.mxu0 0.0
    %141 = vmatpush2.msra.mxu0 0.0
    %142 = vmatprep.subr.mxu0 0.0
    %143 = vmatpush2.msra.mxu0 0.0
    %144 = vmatprep.subr.mxu0 0.0
    %145 = vmatpush2.msra.mxu0 0.0
    %146 = vmatprep.subr.mxu0 0.0
    %147 = vmatpush2.msra.mxu0 0.0
    %148 = vmatprep.subr.mxu0 0.0
    %149 = vmatpush2.msra.mxu0 0.0
    %150 = vmatprep.subr.mxu0 0.0
    %151 = vmatpush2.msra.mxu0 0.0
    %152 = vmatprep.subr.mxu0 0.0
    %153 = vmatpush2.msra.mxu0 0.0
    %154 = vmatprep.subr.mxu0 0.0
    %155 = vmatpush2.msra.mxu0 0.0
    %156 = vmatprep.subr.mxu0 0.0
    %157 = vmatpush2.msra.mxu0 0.0
    %158 = vmatprep.subr.mxu0 0.0
    %159 = vmatpush2.msra.mxu0 0.0
    %160 = vmatprep.subr.mxu0 0.0
    %161 = vmatpush2.msra.mxu0 0.0
    %162 = vmatprep.mubr.f32.mxu0 0.0
    %163 = vmatmul.mubr.f32.gmra.mxu0 %v96
    %v164 = vpop.f32.mrf.mxu0
    %v165 = vadd.f32 %v92, %v164
    %v166 = vpop.f32.mrf.mxu0
    %167 = vdwg.mxu0
    %v168 = vmax.f32 %v165, 0.0
    %v169 = vld [vmem:[#allocation6] sm:$0xff]
    %v170 = vld [vmem:[#allocation6 + $0x8] sm:$0xff]
    %v171 = vld [vmem:[#allocation6 + $0x10] sm:$0xff]
    %v172 = vld [vmem:[#allocation6 + $0x18] sm:$0xff]
    %v173 = vld [vmem:[#allocation6 + $0x20] sm:$0xff]
    %v174 = vld [vmem:[#allocation6 + $0x28] sm:$0xff]
    %v175 = vld [vmem:[#allocation6 + $0x30] sm:$0xff]
    %v176 = vld [vmem:[#allocation6 + $0x38] sm:$0xff]
    %v177 = vld [vmem:[#allocation6 + $0x40] sm:$0xff]
    %v178 = vld [vmem:[#allocation6 + $0x48] sm:$0xff]
    %v179 = vld [vmem:[#allocation6 + $0x50] sm:$0xff]
    %v180 = vld [vmem:[#allocation6 + $0x58] sm:$0xff]
    %v181 = vld [vmem:[#allocation6 + $0x60] sm:$0xff]
    %v182 = vld [vmem:[#allocation6 + $0x68] sm:$0xff]
    %v183 = vld [vmem:[#allocation6 + $0x70] sm:$0xff]
    %v184 = vld [vmem:[#allocation6 + $0x78] sm:$0xff]
    %v185 = vunpack.c.l.bf16 %v169
    %v186 = vunpack.c.h.bf16 %v169
    %v187 = vunpack.c.l.bf16 %v170
    %v188 = vunpack.c.h.bf16 %v170
    %v189 = vunpack.c.l.bf16 %v171
    %v190 = vunpack.c.h.bf16 %v171
    %v191 = vunpack.c.l.bf16 %v172
    %v192 = vunpack.c.h.bf16 %v172
    %v193 = vunpack.c.l.bf16 %v173
    %v194 = vunpack.c.h.bf16 %v173
    %v195 = vunpack.c.l.bf16 %v174
    %v196 = vunpack.c.h.bf16 %v174
    %v197 = vunpack.c.l.bf16 %v175
    %v198 = vunpack.c.h.bf16 %v175
    %v199 = vunpack.c.l.bf16 %v176
    %v200 = vunpack.c.h.bf16 %v176
    %v201 = vunpack.c.l.bf16 %v177
    %v202 = vunpack.c.h.bf16 %v177
    %v203 = vunpack.c.l.bf16 %v178
    %v204 = vunpack.c.h.bf16 %v178
    %v205 = vunpack.c.l.bf16 %v179
    %v206 = vunpack.c.h.bf16 %v179
    %v207 = vunpack.c.l.bf16 %v180
    %v208 = vunpack.c.h.bf16 %v180
    %v209 = vunpack.c.l.bf16 %v181
    %v210 = vunpack.c.h.bf16 %v181
    %v211 = vunpack.c.l.bf16 %v182
    %v212 = vunpack.c.h.bf16 %v182
    %v213 = vunpack.c.l.bf16 %v183
    %v214 = vunpack.c.h.bf16 %v183
    %v215 = vunpack.c.l.bf16 %v184
    %v216 = vunpack.c.h.bf16 %v184
    %v217 = vld [vmem:[%s4] sm:$0x3]
    %v219 = vlaneseq
    %v220 = vshrl.u32 %v219, 7
    %v221 = vsub.s32 0, %v220
    %v222 = vrot.slane %v217, %v221
    %v223 = vlaneseq
    %v224 = vshrl.u32 %v223, 7
    %v225 = vsub.s32 1, %v224
    %v226 = vrot.slane %v217, %v225
    %229 = vmatprep.subr.mxu0 %v216
    %230 = vmatpush1.msra.mxu0 %v215
    %231 = vmatprep.subr.mxu0 %v214
    %232 = vmatpush1.msra.mxu0 %v213
    %233 = vmatprep.subr.mxu0 %v212
    %234 = vmatpush1.msra.mxu0 %v211
    %235 = vmatprep.subr.mxu0 %v210
    %236 = vmatpush1.msra.mxu0 %v209
    %237 = vmatprep.subr.mxu0 %v208
    %238 = vmatpush1.msra.mxu0 %v207
    %239 = vmatprep.subr.mxu0 %v206
    %240 = vmatpush1.msra.mxu0 %v205
    %241 = vmatprep.subr.mxu0 %v204
    %242 = vmatpush1.msra.mxu0 %v203
    %243 = vmatprep.subr.mxu0 %v202
    %244 = vmatpush1.msra.mxu0 %v201
    %245 = vmatprep.subr.mxu0 %v200
    %246 = vmatpush1.msra.mxu0 %v199
    %247 = vmatprep.subr.mxu0 %v198
    %248 = vmatpush1.msra.mxu0 %v197
    %249 = vmatprep.subr.mxu0 %v196
    %250 = vmatpush1.msra.mxu0 %v195
    %251 = vmatprep.subr.mxu0 %v194
    %252 = vmatpush1.msra.mxu0 %v193
    %253 = vmatprep.subr.mxu0 %v192
    %254 = vmatpush1.msra.mxu0 %v191
    %255 = vmatprep.subr.mxu0 %v190
    %256 = vmatpush1.msra.mxu0 %v189
    %257 = vmatprep.subr.mxu0 %v188
    %258 = vmatpush1.msra.mxu0 %v187
    %259 = vmatprep.subr.mxu0 %v186
    %260 = vmatpush1.msra.mxu0 %v185
    %261 = vmatprep.subr.mxu0 0.0
    %262 = vmatpush2.msra.mxu0 0.0
    %263 = vmatprep.subr.mxu0 0.0
    %264 = vmatpush2.msra.mxu0 0.0
    %265 = vmatprep.subr.mxu0 0.0
    %266 = vmatpush2.msra.mxu0 0.0
    %267 = vmatprep.subr.mxu0 0.0
    %268 = vmatpush2.msra.mxu0 0.0
    %269 = vmatprep.subr.mxu0 0.0
    %270 = vmatpush2.msra.mxu0 0.0
    %271 = vmatprep.subr.mxu0 0.0
    %272 = vmatpush2.msra.mxu0 0.0
    %273 = vmatprep.subr.mxu0 0.0
    %274 = vmatpush2.msra.mxu0 0.0
    %275 = vmatprep.subr.mxu0 0.0
    %276 = vmatpush2.msra.mxu0 0.0
    %277 = vmatprep.subr.mxu0 0.0
    %278 = vmatpush2.msra.mxu0 0.0
    %279 = vmatprep.subr.mxu0 0.0
    %280 = vmatpush2.msra.mxu0 0.0
    %281 = vmatprep.subr.mxu0 0.0
    %282 = vmatpush2.msra.mxu0 0.0
    %283 = vmatprep.subr.mxu0 0.0
    %284 = vmatpush2.msra.mxu0 0.0
    %285 = vmatprep.subr.mxu0 0.0
    %286 = vmatpush2.msra.mxu0 0.0
    %287 = vmatprep.subr.mxu0 0.0
    %288 = vmatpush2.msra.mxu0 0.0
    %289 = vmatprep.subr.mxu0 0.0
    %290 = vmatpush2.msra.mxu0 0.0
    %291 = vmatprep.subr.mxu0 0.0
    %292 = vmatpush2.msra.mxu0 0.0
    %293 = vmatprep.mubr.f32.mxu0 0.0
    %294 = vmatmul.mubr.f32.gmra.mxu0 %v168
    %v295 = vpop.f32.mrf.mxu0
    %v296 = vadd.f32 %v222, %v295
    %v297 = vpop.f32.mrf.mxu0
    %v298 = vadd.f32 %v226, %v297
    %299 = vdwg.mxu0
    %v300 = vmax.f32 %v296, 0.0
    %v301 = vmax.f32 %v298, 0.0
    %v302 = vld [vmem:[#allocation7] sm:$0xff]
    %v303 = vld [vmem:[#allocation7 + $0x8] sm:$0xff]
    %v304 = vld [vmem:[#allocation7 + $0x10] sm:$0xf]
    %v305 = vld [vmem:[#allocation7 + $0x14] sm:$0xff]
    %v306 = vld [vmem:[#allocation7 + $0x1c] sm:$0xff]
    %v307 = vld [vmem:[#allocation7 + $0x24] sm:$0xf]
    %v308 = vld [vmem:[#allocation7 + $0x28] sm:$0xff]
    %v309 = vld [vmem:[#allocation7 + $0x30] sm:$0xff]
    %v310 = vld [vmem:[#allocation7 + $0x38] sm:$0xf]
    %v311 = vld [vmem:[#allocation7 + $0x3c] sm:$0xff]
    %v312 = vld [vmem:[#allocation7 + $0x44] sm:$0xff]
    %v313 = vld [vmem:[#allocation7 + $0x4c] sm:$0xf]
    %v314 = vld [vmem:[#allocation7 + $0x50] sm:$0xff]
    %v315 = vld [vmem:[#allocation7 + $0x58] sm:$0xff]
    %v316 = vld [vmem:[#allocation7 + $0x60] sm:$0xf]
    %v317 = vld [vmem:[#allocation7 + $0x64] sm:$0xff]
    %v318 = vld [vmem:[#allocation7 + $0x6c] sm:$0xff]
    %v319 = vld [vmem:[#allocation7 + $0x74] sm:$0xf]
    %v320 = vld [vmem:[#allocation7 + $0x78] sm:$0xff]
    %v321 = vld [vmem:[#allocation7 + $0x80] sm:$0xff]
    %v322 = vld [vmem:[#allocation7 + $0x88] sm:$0xf]
    %v323 = vld [vmem:[#allocation7 + $0x8c] sm:$0xff]
    %v324 = vld [vmem:[#allocation7 + $0x94] sm:$0xff]
    %v325 = vld [vmem:[#allocation7 + $0x9c] sm:$0xf]
    %v326 = vld [vmem:[#allocation7 + $0xa0] sm:$0xff]
    %v327 = vld [vmem:[#allocation7 + $0xa8] sm:$0xff]
    %v328 = vld [vmem:[#allocation7 + $0xb0] sm:$0xf]
    %v329 = vld [vmem:[#allocation7 + $0xb4] sm:$0xff]
    %v330 = vld [vmem:[#allocation7 + $0xbc] sm:$0xff]
    %v331 = vld [vmem:[#allocation7 + $0xc4] sm:$0xf]
    %v332 = vld [vmem:[#allocation7 + $0xc8] sm:$0xff]
    %v333 = vld [vmem:[#allocation7 + $0xd0] sm:$0xff]
    %v334 = vld [vmem:[#allocation7 + $0xd8] sm:$0xf]
    %v335 = vld [vmem:[#allocation7 + $0xdc] sm:$0xff]
    %v336 = vld [vmem:[#allocation7 + $0xe4] sm:$0xff]
    %v337 = vld [vmem:[#allocation7 + $0xec] sm:$0xf]
    %v338 = vld [vmem:[#allocation7 + $0xf0] sm:$0xff]
    %v339 = vld [vmem:[#allocation7 + $0xf8] sm:$0xff]
    %v340 = vld [vmem:[#allocation7 + $0x100] sm:$0xf]
    %v341 = vld [vmem:[#allocation7 + $0x104] sm:$0xff]
    %v342 = vld [vmem:[#allocation7 + $0x10c] sm:$0xff]
    %v343 = vld [vmem:[#allocation7 + $0x114] sm:$0xf]
    %v344 = vld [vmem:[#allocation7 + $0x118] sm:$0xff]
    %v345 = vld [vmem:[#allocation7 + $0x120] sm:$0xff]
    %v346 = vld [vmem:[#allocation7 + $0x128] sm:$0xf]
    %v347 = vld [vmem:[#allocation7 + $0x12c] sm:$0xff]
    %v348 = vld [vmem:[#allocation7 + $0x134] sm:$0xff]
    %v349 = vld [vmem:[#allocation7 + $0x13c] sm:$0xf]
    %v350 = vld [vmem:[#allocation7 + $0x140] sm:$0xff]
    %v351 = vld [vmem:[#allocation7 + $0x148] sm:$0xff]
    %v352 = vld [vmem:[#allocation7 + $0x150] sm:$0xf]
    %v353 = vld [vmem:[#allocation7 + $0x154] sm:$0xff]
    %v354 = vld [vmem:[#allocation7 + $0x15c] sm:$0xff]
    %v355 = vld [vmem:[#allocation7 + $0x164] sm:$0xf]
    %v356 = vld [vmem:[#allocation7 + $0x168] sm:$0xff]
    %v357 = vld [vmem:[#allocation7 + $0x170] sm:$0xff]
    %v358 = vld [vmem:[#allocation7 + $0x178] sm:$0xf]
    %v359 = vld [vmem:[#allocation7 + $0x17c] sm:$0xff]
    %v360 = vld [vmem:[#allocation7 + $0x184] sm:$0xff]
    %v361 = vld [vmem:[#allocation7 + $0x18c] sm:$0xf]
    %v362 = vld [vmem:[#allocation7 + $0x190] sm:$0xff]
    %v363 = vld [vmem:[#allocation7 + $0x198] sm:$0xff]
    %v364 = vld [vmem:[#allocation7 + $0x1a0] sm:$0xf]
    %v365 = vld [vmem:[#allocation7 + $0x1a4] sm:$0xff]
    %v366 = vld [vmem:[#allocation7 + $0x1ac] sm:$0xff]
    %v367 = vld [vmem:[#allocation7 + $0x1b4] sm:$0xf]
    %v368 = vld [vmem:[#allocation7 + $0x1b8] sm:$0xff]
    %v369 = vld [vmem:[#allocation7 + $0x1c0] sm:$0xff]
    %v370 = vld [vmem:[#allocation7 + $0x1c8] sm:$0xf]
    %v371 = vld [vmem:[#allocation7 + $0x1cc] sm:$0xff]
    %v372 = vld [vmem:[#allocation7 + $0x1d4] sm:$0xff]
    %v373 = vld [vmem:[#allocation7 + $0x1dc] sm:$0xf]
    %v374 = vld [vmem:[#allocation7 + $0x1e0] sm:$0xff]
    %v375 = vld [vmem:[#allocation7 + $0x1e8] sm:$0xff]
    %v376 = vld [vmem:[#allocation7 + $0x1f0] sm:$0xf]
    %v377 = vld [vmem:[#allocation7 + $0x1f4] sm:$0xff]
    %v378 = vld [vmem:[#allocation7 + $0x1fc] sm:$0xff]
    %v379 = vld [vmem:[#allocation7 + $0x204] sm:$0xf]
    %v380 = vld [vmem:[#allocation7 + $0x208] sm:$0xff]
    %v381 = vld [vmem:[#allocation7 + $0x210] sm:$0xff]
    %v382 = vld [vmem:[#allocation7 + $0x218] sm:$0xf]
    %v383 = vld [vmem:[#allocation7 + $0x21c] sm:$0xff]
    %v384 = vld [vmem:[#allocation7 + $0x224] sm:$0xff]
    %v385 = vld [vmem:[#allocation7 + $0x22c] sm:$0xf]
    %v386 = vld [vmem:[#allocation7 + $0x230] sm:$0xff]
    %v387 = vld [vmem:[#allocation7 + $0x238] sm:$0xff]
    %v388 = vld [vmem:[#allocation7 + $0x240] sm:$0xf]
    %v389 = vld [vmem:[#allocation7 + $0x244] sm:$0xff]
    %v390 = vld [vmem:[#allocation7 + $0x24c] sm:$0xff]
    %v391 = vld [vmem:[#allocation7 + $0x254] sm:$0xf]
    %v392 = vld [vmem:[#allocation7 + $0x258] sm:$0xff]
    %v393 = vld [vmem:[#allocation7 + $0x260] sm:$0xff]
    %v394 = vld [vmem:[#allocation7 + $0x268] sm:$0xf]
    %v395 = vld [vmem:[#allocation7 + $0x26c] sm:$0xff]
    %v396 = vld [vmem:[#allocation7 + $0x274] sm:$0xff]
    %v397 = vld [vmem:[#allocation7 + $0x27c] sm:$0xf]
    %v398 = vunpack.c.l.bf16 %v302
    %v399 = vunpack.c.h.bf16 %v302
    %v400 = vunpack.c.l.bf16 %v303
    %v401 = vunpack.c.h.bf16 %v303
    %v402 = vunpack.c.l.bf16 %v304
    %v403 = vunpack.c.l.bf16 %v305
    %v404 = vunpack.c.h.bf16 %v305
    %v405 = vunpack.c.l.bf16 %v306
    %v406 = vunpack.c.h.bf16 %v306
    %v407 = vunpack.c.l.bf16 %v307
    %v408 = vunpack.c.l.bf16 %v308
    %v409 = vunpack.c.h.bf16 %v308
    %v410 = vunpack.c.l.bf16 %v309
    %v411 = vunpack.c.h.bf16 %v309
    %v412 = vunpack.c.l.bf16 %v310
    %v413 = vunpack.c.l.bf16 %v311
    %v414 = vunpack.c.h.bf16 %v311
    %v415 = vunpack.c.l.bf16 %v312
    %v416 = vunpack.c.h.bf16 %v312
    %v417 = vunpack.c.l.bf16 %v313
    %v418 = vunpack.c.l.bf16 %v314
    %v419 = vunpack.c.h.bf16 %v314
    %v420 = vunpack.c.l.bf16 %v315
    %v421 = vunpack.c.h.bf16 %v315
    %v422 = vunpack.c.l.bf16 %v316
    %v423 = vunpack.c.l.bf16 %v317
    %v424 = vunpack.c.h.bf16 %v317
    %v425 = vunpack.c.l.bf16 %v318
    %v426 = vunpack.c.h.bf16 %v318
    %v427 = vunpack.c.l.bf16 %v319
    %v428 = vunpack.c.l.bf16 %v320
    %v429 = vunpack.c.h.bf16 %v320
    %v430 = vunpack.c.l.bf16 %v321
    %v431 = vunpack.c.h.bf16 %v321
    %v432 = vunpack.c.l.bf16 %v322
    %v433 = vunpack.c.l.bf16 %v323
    %v434 = vunpack.c.h.bf16 %v323
    %v435 = vunpack.c.l.bf16 %v324
    %v436 = vunpack.c.h.bf16 %v324
    %v437 = vunpack.c.l.bf16 %v325
    %v438 = vunpack.c.l.bf16 %v326
    %v439 = vunpack.c.h.bf16 %v326
    %v440 = vunpack.c.l.bf16 %v327
    %v441 = vunpack.c.h.bf16 %v327
    %v442 = vunpack.c.l.bf16 %v328
    %v443 = vunpack.c.l.bf16 %v329
    %v444 = vunpack.c.h.bf16 %v329
    %v445 = vunpack.c.l.bf16 %v330
    %v446 = vunpack.c.h.bf16 %v330
    %v447 = vunpack.c.l.bf16 %v331
    %v448 = vunpack.c.l.bf16 %v332
    %v449 = vunpack.c.h.bf16 %v332
    %v450 = vunpack.c.l.bf16 %v333
    %v451 = vunpack.c.h.bf16 %v333
    %v452 = vunpack.c.l.bf16 %v334
    %v453 = vunpack.c.l.bf16 %v335
    %v454 = vunpack.c.h.bf16 %v335
    %v455 = vunpack.c.l.bf16 %v336
    %v456 = vunpack.c.h.bf16 %v336
    %v457 = vunpack.c.l.bf16 %v337
    %v458 = vunpack.c.l.bf16 %v338
    %v459 = vunpack.c.h.bf16 %v338
    %v460 = vunpack.c.l.bf16 %v339
    %v461 = vunpack.c.h.bf16 %v339
    %v462 = vunpack.c.l.bf16 %v340
    %v463 = vunpack.c.l.bf16 %v341
    %v464 = vunpack.c.h.bf16 %v341
    %v465 = vunpack.c.l.bf16 %v342
    %v466 = vunpack.c.h.bf16 %v342
    %v467 = vunpack.c.l.bf16 %v343
    %v468 = vunpack.c.l.bf16 %v344
    %v469 = vunpack.c.h.bf16 %v344
    %v470 = vunpack.c.l.bf16 %v345
    %v471 = vunpack.c.h.bf16 %v345
    %v472 = vunpack.c.l.bf16 %v346
    %v473 = vunpack.c.l.bf16 %v347
    %v474 = vunpack.c.h.bf16 %v347
    %v475 = vunpack.c.l.bf16 %v348
    %v476 = vunpack.c.h.bf16 %v348
    %v477 = vunpack.c.l.bf16 %v349
    %v478 = vunpack.c.l.bf16 %v350
    %v479 = vunpack.c.h.bf16 %v350
    %v480 = vunpack.c.l.bf16 %v351
    %v481 = vunpack.c.h.bf16 %v351
    %v482 = vunpack.c.l.bf16 %v352
    %v483 = vunpack.c.l.bf16 %v353
    %v484 = vunpack.c.h.bf16 %v353
    %v485 = vunpack.c.l.bf16 %v354
    %v486 = vunpack.c.h.bf16 %v354
    %v487 = vunpack.c.l.bf16 %v355
    %v488 = vunpack.c.l.bf16 %v356
    %v489 = vunpack.c.h.bf16 %v356
    %v490 = vunpack.c.l.bf16 %v357
    %v491 = vunpack.c.h.bf16 %v357
    %v492 = vunpack.c.l.bf16 %v358
    %v493 = vunpack.c.l.bf16 %v359
    %v494 = vunpack.c.h.bf16 %v359
    %v495 = vunpack.c.l.bf16 %v360
    %v496 = vunpack.c.h.bf16 %v360
    %v497 = vunpack.c.l.bf16 %v361
    %v498 = vunpack.c.l.bf16 %v362
    %v499 = vunpack.c.h.bf16 %v362
    %v500 = vunpack.c.l.bf16 %v363
    %v501 = vunpack.c.h.bf16 %v363
    %v502 = vunpack.c.l.bf16 %v364
    %v503 = vunpack.c.l.bf16 %v365
    %v504 = vunpack.c.h.bf16 %v365
    %v505 = vunpack.c.l.bf16 %v366
    %v506 = vunpack.c.h.bf16 %v366
    %v507 = vunpack.c.l.bf16 %v367
    %v508 = vunpack.c.l.bf16 %v368
    %v509 = vunpack.c.h.bf16 %v368
    %v510 = vunpack.c.l.bf16 %v369
    %v511 = vunpack.c.h.bf16 %v369
    %v512 = vunpack.c.l.bf16 %v370
    %v513 = vunpack.c.l.bf16 %v371
    %v514 = vunpack.c.h.bf16 %v371
    %v515 = vunpack.c.l.bf16 %v372
    %v516 = vunpack.c.h.bf16 %v372
    %v517 = vunpack.c.l.bf16 %v373
    %v518 = vunpack.c.l.bf16 %v374
    %v519 = vunpack.c.h.bf16 %v374
    %v520 = vunpack.c.l.bf16 %v375
    %v521 = vunpack.c.h.bf16 %v375
    %v522 = vunpack.c.l.bf16 %v376
    %v523 = vunpack.c.l.bf16 %v377
    %v524 = vunpack.c.h.bf16 %v377
    %v525 = vunpack.c.l.bf16 %v378
    %v526 = vunpack.c.h.bf16 %v378
    %v527 = vunpack.c.l.bf16 %v379
    %v528 = vunpack.c.l.bf16 %v380
    %v529 = vunpack.c.h.bf16 %v380
    %v530 = vunpack.c.l.bf16 %v381
    %v531 = vunpack.c.h.bf16 %v381
    %v532 = vunpack.c.l.bf16 %v382
    %v533 = vunpack.c.l.bf16 %v383
    %v534 = vunpack.c.h.bf16 %v383
    %v535 = vunpack.c.l.bf16 %v384
    %v536 = vunpack.c.h.bf16 %v384
    %v537 = vunpack.c.l.bf16 %v385
    %v538 = vunpack.c.l.bf16 %v386
    %v539 = vunpack.c.h.bf16 %v386
    %v540 = vunpack.c.l.bf16 %v387
    %v541 = vunpack.c.h.bf16 %v387
    %v542 = vunpack.c.l.bf16 %v388
    %v543 = vunpack.c.l.bf16 %v389
    %v544 = vunpack.c.h.bf16 %v389
    %v545 = vunpack.c.l.bf16 %v390
    %v546 = vunpack.c.h.bf16 %v390
    %v547 = vunpack.c.l.bf16 %v391
    %v548 = vunpack.c.l.bf16 %v392
    %v549 = vunpack.c.h.bf16 %v392
    %v550 = vunpack.c.l.bf16 %v393
    %v551 = vunpack.c.h.bf16 %v393
    %v552 = vunpack.c.l.bf16 %v394
    %v553 = vunpack.c.l.bf16 %v395
    %v554 = vunpack.c.h.bf16 %v395
    %v555 = vunpack.c.l.bf16 %v396
    %v556 = vunpack.c.h.bf16 %v396
    %v557 = vunpack.c.l.bf16 %v397
    %v558 = vld [vmem:[%s6] sm:$0x1f]
    %v560 = vlaneseq
    %v561 = vshrl.u32 %v560, 7
    %v562 = vsub.s32 0, %v561
    %v563 = vrot.slane %v558, %v562
    %v564 = vlaneseq
    %v565 = vshrl.u32 %v564, 7
    %v566 = vsub.s32 1, %v565
    %v567 = vrot.slane %v558, %v566
    %v568 = vlaneseq
    %v569 = vshrl.u32 %v568, 7
    %v570 = vsub.s32 2, %v569
    %v571 = vrot.slane %v558, %v570
    %v572 = vlaneseq
    %v573 = vshrl.u32 %v572, 7
    %v574 = vsub.s32 3, %v573
    %v575 = vrot.slane %v558, %v574
    %v576 = vlaneseq
    %v577 = vshrl.u32 %v576, 7
    %v578 = vsub.s32 4, %v577
    %v579 = vrot.slane %v558, %v578
    %585 = vmatprep.subr.mxu0 %v474
    %586 = vmatpush1.msra.mxu0 %v473
    %587 = vmatprep.subr.mxu0 %v469
    %588 = vmatpush1.msra.mxu0 %v468
    %589 = vmatprep.subr.mxu0 %v464
    %590 = vmatpush1.msra.mxu0 %v463
    %591 = vmatprep.subr.mxu0 %v459
    %592 = vmatpush1.msra.mxu0 %v458
    %593 = vmatprep.subr.mxu0 %v454
    %594 = vmatpush1.msra.mxu0 %v453
    %595 = vmatprep.subr.mxu0 %v449
    %596 = vmatpush1.msra.mxu0 %v448
    %597 = vmatprep.subr.mxu0 %v444
    %598 = vmatpush1.msra.mxu0 %v443
    %599 = vmatprep.subr.mxu0 %v439
    %600 = vmatpush1.msra.mxu0 %v438
    %601 = vmatprep.subr.mxu0 %v434
    %602 = vmatpush1.msra.mxu0 %v433
    %603 = vmatprep.subr.mxu0 %v429
    %604 = vmatpush1.msra.mxu0 %v428
    %605 = vmatprep.subr.mxu0 %v424
    %606 = vmatpush1.msra.mxu0 %v423
    %607 = vmatprep.subr.mxu0 %v419
    %608 = vmatpush1.msra.mxu0 %v418
    %609 = vmatprep.subr.mxu0 %v414
    %610 = vmatpush1.msra.mxu0 %v413
    %611 = vmatprep.subr.mxu0 %v409
    %612 = vmatpush1.msra.mxu0 %v408
    %613 = vmatprep.subr.mxu0 %v404
    %614 = vmatpush1.msra.mxu0 %v403
    %615 = vmatprep.subr.mxu0 %v399
    %616 = vmatpush1.msra.mxu0 %v398
    %617 = vmatprep.subr.mxu0 %v554
    %618 = vmatpush2.msra.mxu0 %v553
    %619 = vmatprep.subr.mxu0 %v549
    %620 = vmatpush2.msra.mxu0 %v548
    %621 = vmatprep.subr.mxu0 %v544
    %622 = vmatpush2.msra.mxu0 %v543
    %623 = vmatprep.subr.mxu0 %v539
    %624 = vmatpush2.msra.mxu0 %v538
    %625 = vmatprep.subr.mxu0 %v534
    %626 = vmatpush2.msra.mxu0 %v533
    %627 = vmatprep.subr.mxu0 %v529
    %628 = vmatpush2.msra.mxu0 %v528
    %629 = vmatprep.subr.mxu0 %v524
    %630 = vmatpush2.msra.mxu0 %v523
    %631 = vmatprep.subr.mxu0 %v519
    %632 = vmatpush2.msra.mxu0 %v518
    %633 = vmatprep.subr.mxu0 %v514
    %634 = vmatpush2.msra.mxu0 %v513
    %635 = vmatprep.subr.mxu0 %v509
    %636 = vmatpush2.msra.mxu0 %v508
    %637 = vmatprep.subr.mxu0 %v504
    %638 = vmatpush2.msra.mxu0 %v503
    %639 = vmatprep.subr.mxu0 %v499
    %640 = vmatpush2.msra.mxu0 %v498
    %641 = vmatprep.subr.mxu0 %v494
    %642 = vmatpush2.msra.mxu0 %v493
    %643 = vmatprep.subr.mxu0 %v489
    %644 = vmatpush2.msra.mxu0 %v488
    %645 = vmatprep.subr.mxu0 %v484
    %646 = vmatpush2.msra.mxu0 %v483
    %647 = vmatprep.subr.mxu0 %v479
    %648 = vmatpush2.msra.mxu0 %v478
    %649 = vmatprep.mubr.f32.mxu0 %v301
    %650 = vmatmul.mubr.f32.gmra.mxu0 %v300
    %v651 = vpop.f32.mrf.mxu0
    %v652 = vadd.f32 %v563, %v651
    %v653 = vpop.f32.mrf.mxu0
    %v654 = vadd.f32 %v567, %v653
    %655 = vdwg.mxu0
    %656 = vmatprep.subr.mxu0 %v476
    %657 = vmatpush1.msra.mxu0 %v475
    %658 = vmatprep.subr.mxu0 %v471
    %659 = vmatpush1.msra.mxu0 %v470
    %660 = vmatprep.subr.mxu0 %v466
    %661 = vmatpush1.msra.mxu0 %v465
    %662 = vmatprep.subr.mxu0 %v461
    %663 = vmatpush1.msra.mxu0 %v460
    %664 = vmatprep.subr.mxu0 %v456
    %665 = vmatpush1.msra.mxu0 %v455
    %666 = vmatprep.subr.mxu0 %v451
    %667 = vmatpush1.msra.mxu0 %v450
    %668 = vmatprep.subr.mxu0 %v446
    %669 = vmatpush1.msra.mxu0 %v445
    %670 = vmatprep.subr.mxu0 %v441
    %671 = vmatpush1.msra.mxu0 %v440
    %672 = vmatprep.subr.mxu0 %v436
    %673 = vmatpush1.msra.mxu0 %v435
    %674 = vmatprep.subr.mxu0 %v431
    %675 = vmatpush1.msra.mxu0 %v430
    %676 = vmatprep.subr.mxu0 %v426
    %677 = vmatpush1.msra.mxu0 %v425
    %678 = vmatprep.subr.mxu0 %v421
    %679 = vmatpush1.msra.mxu0 %v420
    %680 = vmatprep.subr.mxu0 %v416
    %681 = vmatpush1.msra.mxu0 %v415
    %682 = vmatprep.subr.mxu0 %v411
    %683 = vmatpush1.msra.mxu0 %v410
    %684 = vmatprep.subr.mxu0 %v406
    %685 = vmatpush1.msra.mxu0 %v405
    %686 = vmatprep.subr.mxu0 %v401
    %687 = vmatpush1.msra.mxu0 %v400
    %688 = vmatprep.subr.mxu0 %v556
    %689 = vmatpush2.msra.mxu0 %v555
    %690 = vmatprep.subr.mxu0 %v551
    %691 = vmatpush2.msra.mxu0 %v550
    %692 = vmatprep.subr.mxu0 %v546
    %693 = vmatpush2.msra.mxu0 %v545
    %694 = vmatprep.subr.mxu0 %v541
    %695 = vmatpush2.msra.mxu0 %v540
    %696 = vmatprep.subr.mxu0 %v536
    %697 = vmatpush2.msra.mxu0 %v535
    %698 = vmatprep.subr.mxu0 %v531
    %699 = vmatpush2.msra.mxu0 %v530
    %700 = vmatprep.subr.mxu0 %v526
    %701 = vmatpush2.msra.mxu0 %v525
    %702 = vmatprep.subr.mxu0 %v521
    %703 = vmatpush2.msra.mxu0 %v520
    %704 = vmatprep.subr.mxu0 %v516
    %705 = vmatpush2.msra.mxu0 %v515
    %706 = vmatprep.subr.mxu0 %v511
    %707 = vmatpush2.msra.mxu0 %v510
    %708 = vmatprep.subr.mxu0 %v506
    %709 = vmatpush2.msra.mxu0 %v505
    %710 = vmatprep.subr.mxu0 %v501
    %711 = vmatpush2.msra.mxu0 %v500
    %712 = vmatprep.subr.mxu0 %v496
    %713 = vmatpush2.msra.mxu0 %v495
    %714 = vmatprep.subr.mxu0 %v491
    %715 = vmatpush2.msra.mxu0 %v490
    %716 = vmatprep.subr.mxu0 %v486
    %717 = vmatpush2.msra.mxu0 %v485
    %718 = vmatprep.subr.mxu0 %v481
    %719 = vmatpush2.msra.mxu0 %v480
    %720 = vmatprep.mubr.f32.mxu0 %v301
    %721 = vmatmul.mubr.f32.gmra.mxu0 %v300
    %v722 = vpop.f32.mrf.mxu0
    %v723 = vadd.f32 %v571, %v722
    %v724 = vpop.f32.mrf.mxu0
    %v725 = vadd.f32 %v575, %v724
    %726 = vdwg.mxu0
    %727 = vmatprep.subr.mxu0 0.0
    %728 = vmatpush1.msra.mxu0 %v477
    %729 = vmatprep.subr.mxu0 0.0
    %730 = vmatpush1.msra.mxu0 %v472
    %731 = vmatprep.subr.mxu0 0.0
    %732 = vmatpush1.msra.mxu0 %v467
    %733 = vmatprep.subr.mxu0 0.0
    %734 = vmatpush1.msra.mxu0 %v462
    %735 = vmatprep.subr.mxu0 0.0
    %736 = vmatpush1.msra.mxu0 %v457
    %737 = vmatprep.subr.mxu0 0.0
    %738 = vmatpush1.msra.mxu0 %v452
    %739 = vmatprep.subr.mxu0 0.0
    %740 = vmatpush1.msra.mxu0 %v447
    %741 = vmatprep.subr.mxu0 0.0
    %742 = vmatpush1.msra.mxu0 %v442
    %743 = vmatprep.subr.mxu0 0.0
    %744 = vmatpush1.msra.mxu0 %v437
    %745 = vmatprep.subr.mxu0 0.0
    %746 = vmatpush1.msra.mxu0 %v432
    %747 = vmatprep.subr.mxu0 0.0
    %748 = vmatpush1.msra.mxu0 %v427
    %749 = vmatprep.subr.mxu0 0.0
    %750 = vmatpush1.msra.mxu0 %v422
    %751 = vmatprep.subr.mxu0 0.0
    %752 = vmatpush1.msra.mxu0 %v417
    %753 = vmatprep.subr.mxu0 0.0
    %754 = vmatpush1.msra.mxu0 %v412
    %755 = vmatprep.subr.mxu0 0.0
    %756 = vmatpush1.msra.mxu0 %v407
    %757 = vmatprep.subr.mxu0 0.0
    %758 = vmatpush1.msra.mxu0 %v402
    %759 = vmatprep.subr.mxu0 0.0
    %760 = vmatpush2.msra.mxu0 %v557
    %761 = vmatprep.subr.mxu0 0.0
    %762 = vmatpush2.msra.mxu0 %v552
    %763 = vmatprep.subr.mxu0 0.0
    %764 = vmatpush2.msra.mxu0 %v547
    %765 = vmatprep.subr.mxu0 0.0
    %766 = vmatpush2.msra.mxu0 %v542
    %767 = vmatprep.subr.mxu0 0.0
    %768 = vmatpush2.msra.mxu0 %v537
    %769 = vmatprep.subr.mxu0 0.0
    %770 = vmatpush2.msra.mxu0 %v532
    %771 = vmatprep.subr.mxu0 0.0
    %772 = vmatpush2.msra.mxu0 %v527
    %773 = vmatprep.subr.mxu0 0.0
    %774 = vmatpush2.msra.mxu0 %v522
    %775 = vmatprep.subr.mxu0 0.0
    %776 = vmatpush2.msra.mxu0 %v517
    %777 = vmatprep.subr.mxu0 0.0
    %778 = vmatpush2.msra.mxu0 %v512
    %779 = vmatprep.subr.mxu0 0.0
    %780 = vmatpush2.msra.mxu0 %v507
    %781 = vmatprep.subr.mxu0 0.0
    %782 = vmatpush2.msra.mxu0 %v502
    %783 = vmatprep.subr.mxu0 0.0
    %784 = vmatpush2.msra.mxu0 %v497
    %785 = vmatprep.subr.mxu0 0.0
    %786 = vmatpush2.msra.mxu0 %v492
    %787 = vmatprep.subr.mxu0 0.0
    %788 = vmatpush2.msra.mxu0 %v487
    %789 = vmatprep.subr.mxu0 0.0
    %790 = vmatpush2.msra.mxu0 %v482
    %791 = vmatprep.mubr.f32.mxu0 %v301
    %792 = vmatmul.mubr.f32.gmra.mxu0 %v300
    %v793 = vpop.f32.mrf.mxu0
    %v794 = vadd.f32 %v579, %v793
    %v795 = vpop.f32.mrf.mxu0
    %796 = vdwg.mxu0
    %v797 = vcombine.low %v652, %v723
    %v798 = vcombine.high %v652, %v723
    %v800 = vunpack.c.l.s4 1983009808
    %v801 = vunpack.c.0.s8 %v800
    %v802 = vlaneseq
    %v803 = vshrl.u32 %v802, 7
    %v804 = vsub.s32 %v801, %v803
    %v805 = vrot.slane %v797, %v804
    %v807 = vunpack.c.l.s4 1983009808
    %v808 = vunpack.c.0.s8 %v807
    %v809 = vlaneseq
    %v810 = vshrl.u32 %v809, 7
    %v811 = vsub.s32 %v808, %v810
    %v812 = vrot.slane %v798, %v811
    %v813 = vcombine.low %v654, %v725
    %v814 = vcombine.high %v654, %v725
    %v816 = vunpack.c.l.s4 1983009808
    %v817 = vunpack.c.0.s8 %v816
    %v818 = vlaneseq
    %v819 = vshrl.u32 %v818, 7
    %v820 = vsub.s32 %v817, %v819
    %v821 = vrot.slane %v813, %v820
    %v823 = vunpack.c.l.s4 1983009808
    %v824 = vunpack.c.0.s8 %v823
    %v825 = vlaneseq
    %v826 = vshrl.u32 %v825, 7
    %v827 = vsub.s32 %v824, %v826
    %v828 = vrot.slane %v814, %v827
    %v829 = vcombine.low %v805, %v821
    %v830 = vcombine.high %v805, %v821
    %v832 = vunpack.c.l.s4 1934713408
    %v833 = vunpack.c.0.s8 %v832
    %v834 = vlaneseq
    %v835 = vshrl.u32 %v834, 7
    %v836 = vsub.s32 %v833, %v835
    %v837 = vrot.slane %v829, %v836
    %v839 = vunpack.c.l.s4 1934713408
    %v840 = vunpack.c.0.s8 %v839
    %v841 = vlaneseq
    %v842 = vshrl.u32 %v841, 7
    %v843 = vsub.s32 %v840, %v842
    %v844 = vrot.slane %v830, %v843
    %v845 = vcombine.low %v812, %v828
    %v846 = vcombine.high %v812, %v828
    %v848 = vunpack.c.l.s4 1934713408
    %v849 = vunpack.c.0.s8 %v848
    %v850 = vlaneseq
    %v851 = vshrl.u32 %v850, 7
    %v852 = vsub.s32 %v849, %v851
    %v853 = vrot.slane %v845, %v852
    %v855 = vunpack.c.l.s4 1934713408
    %v856 = vunpack.c.0.s8 %v855
    %v857 = vlaneseq
    %v858 = vshrl.u32 %v857, 7
    %v859 = vsub.s32 %v856, %v858
    %v860 = vrot.slane %v846, %v859
    %v861 = vcombine.high %v837, 0.0
    %v862 = vcombine.high %v844, 0.0
    %v863 = vcombine.high %v853, 0.0
    %v864 = vcombine.high %v860, 0.0
    %v866 = vcombine.high %v794, %v794
    %v868 = vunpack.c.l.s4 1966171168
    %v869 = vunpack.c.0.s8 %v868
    %v870 = vlaneseq
    %v871 = vshrl.u32 %v870, 7
    %v872 = vsub.s32 %v869, %v871
    %v873 = vrot.slane %v794, %v872
    %v875 = vunpack.c.l.s4 1966171168
    %v876 = vunpack.c.0.s8 %v875
    %v877 = vlaneseq
    %v878 = vshrl.u32 %v877, 7
    %v879 = vsub.s32 %v876, %v878
    %v880 = vrot.slane %v866, %v879
    %v881 = vcombine.high %v873, %v873
    %v882 = vcombine.high %v880, %v880
    %v884 = vunpack.c.l.s4 1966171168
    %v885 = vunpack.c.0.s8 %v884
    %v886 = vlaneseq
    %v887 = vshrl.u32 %v886, 7
    %v888 = vsub.s32 %v885, %v887
    %v889 = vrot.slane %v873, %v888
    %v891 = vunpack.c.l.s4 1966171168
    %v892 = vunpack.c.0.s8 %v891
    %v893 = vlaneseq
    %v894 = vshrl.u32 %v893, 7
    %v895 = vsub.s32 %v892, %v894
    %v896 = vrot.slane %v880, %v895
    %v898 = vunpack.c.l.s4 1966171168
    %v899 = vunpack.c.0.s8 %v898
    %v900 = vlaneseq
    %v901 = vshrl.u32 %v900, 7
    %v902 = vsub.s32 %v899, %v901
    %v903 = vrot.slane %v881, %v902
    %v905 = vunpack.c.l.s4 1966171168
    %v906 = vunpack.c.0.s8 %v905
    %v907 = vlaneseq
    %v908 = vshrl.u32 %v907, 7
    %v909 = vsub.s32 %v906, %v908
    %v910 = vrot.slane %v882, %v909
    %v911 = vcombine.high %v889, %v889
    %v912 = vcombine.high %v896, %v896
    %v913 = vcombine.high %v903, %v903
    %v914 = vcombine.high %v910, %v910
    %v915 = vlaneseq
    %v916 = vshrl.u32 %v915, 7
    %v917 = vsub.s32 0, %v916
    %v918 = vrot.slane %v889, %v917
    %v919 = vlaneseq
    %v920 = vshrl.u32 %v919, 7
    %v921 = vsub.s32 0, %v920
    %v922 = vrot.slane %v903, %v921
    %v923 = vlaneseq
    %v924 = vshrl.u32 %v923, 7
    %v925 = vsub.s32 0, %v924
    %v926 = vrot.slane %v911, %v925
    %v927 = vlaneseq
    %v928 = vshrl.u32 %v927, 7
    %v929 = vsub.s32 0, %v928
    %v930 = vrot.slane %v913, %v929
    %v931 = vlaneseq
    %v932 = vshrl.u32 %v931, 7
    %v933 = vsub.s32 0, %v932
    %v934 = vrot.slane %v896, %v933
    %v935 = vlaneseq
    %v936 = vshrl.u32 %v935, 7
    %v937 = vsub.s32 0, %v936
    %v938 = vrot.slane %v910, %v937
    %v939 = vlaneseq
    %v940 = vshrl.u32 %v939, 7
    %v941 = vsub.s32 0, %v940
    %v942 = vrot.slane %v912, %v941
    %v943 = vlaneseq
    %v944 = vshrl.u32 %v943, 7
    %v945 = vsub.s32 0, %v944
    %v946 = vrot.slane %v914, %v945
    %v955 = vadd.f32 %v918, %v837
    %v956 = vadd.f32 %v922, %v861
    %v957 = vadd.f32 %v926, %v844
    %v958 = vadd.f32 %v930, %v862
    %v959 = vadd.f32 %v934, %v853
    %v960 = vadd.f32 %v938, %v863
    %v961 = vadd.f32 %v942, %v860
    %v962 = vadd.f32 %v946, %v864
    %vm963 = vcmask 1043456
    %v964 = vsel %vm963, %v837, 0.0
    %v965 = vrot.slane %v964, 4
    %v966 = vadd.f32 %v964, %v965
    %v967 = vrot.slane %v966, 2
    %v968 = vadd.f32 %v966, %v967
    %v969 = vrot.slane %v968, 1
    %v970 = vadd.f32 %v968, %v969
    %v971 = vsel %vm963, %v861, 0.0
    %v972 = vrot.slane %v971, 4
    %v973 = vadd.f32 %v971, %v972
    %v974 = vrot.slane %v973, 2
    %v975 = vadd.f32 %v973, %v974
    %v976 = vrot.slane %v975, 1
    %v977 = vadd.f32 %v975, %v976
    %v978 = vsel %vm963, %v844, 0.0
    %v979 = vrot.slane %v978, 4
    %v980 = vadd.f32 %v978, %v979
    %v981 = vrot.slane %v980, 2
    %v982 = vadd.f32 %v980, %v981
    %v983 = vrot.slane %v982, 1
    %v984 = vadd.f32 %v982, %v983
    %v985 = vsel %vm963, %v862, 0.0
    %v986 = vrot.slane %v985, 4
    %v987 = vadd.f32 %v985, %v986
    %v988 = vrot.slane %v987, 2
    %v989 = vadd.f32 %v987, %v988
    %v990 = vrot.slane %v989, 1
    %v991 = vadd.f32 %v989, %v990
    %v992 = vsel %vm963, %v853, 0.0
    %v993 = vrot.slane %v992, 4
    %v994 = vadd.f32 %v992, %v993
    %v995 = vrot.slane %v994, 2
    %v996 = vadd.f32 %v994, %v995
    %v997 = vrot.slane %v996, 1
    %v998 = vadd.f32 %v996, %v997
    %v999 = vsel %vm963, %v863, 0.0
    %v1000 = vrot.slane %v999, 4
    %v1001 = vadd.f32 %v999, %v1000
    %v1002 = vrot.slane %v1001, 2
    %v1003 = vadd.f32 %v1001, %v1002
    %v1004 = vrot.slane %v1003, 1
    %v1005 = vadd.f32 %v1003, %v1004
    %v1006 = vsel %vm963, %v860, 0.0
    %v1007 = vrot.slane %v1006, 4
    %v1008 = vadd.f32 %v1006, %v1007
    %v1009 = vrot.slane %v1008, 2
    %v1010 = vadd.f32 %v1008, %v1009
    %v1011 = vrot.slane %v1010, 1
    %v1012 = vadd.f32 %v1010, %v1011
    %v1013 = vsel %vm963, %v864, 0.0
    %v1014 = vrot.slane %v1013, 4
    %v1015 = vadd.f32 %v1013, %v1014
    %v1016 = vrot.slane %v1015, 2
    %v1017 = vadd.f32 %v1015, %v1016
    %v1018 = vrot.slane %v1017, 1
    %v1019 = vadd.f32 %v1017, %v1018
    %v1020 = vrcp.pop 4.0
    %v1021 = vmul.f32 %v970, %v1020
    %v1022 = vmul.f32 %v977, %v1020
    %v1023 = vmul.f32 %v984, %v1020
    %v1024 = vmul.f32 %v991, %v1020
    %v1025 = vmul.f32 %v998, %v1020
    %v1026 = vmul.f32 %v1005, %v1020
    %v1027 = vmul.f32 %v1012, %v1020
    %v1028 = vmul.f32 %v1019, %v1020
    %v1029 = vsub.f32 %v955, %v1021
    %v1030 = vsub.f32 %v956, %v1022
    %v1031 = vsub.f32 %v957, %v1023
    %v1032 = vsub.f32 %v958, %v1024
    %v1033 = vsub.f32 %v959, %v1025
    %v1034 = vsub.f32 %v960, %v1026
    %v1035 = vsub.f32 %v961, %v1027
    %v1036 = vsub.f32 %v962, %v1028
    %v1037 = vsel %vm963, %v1029, -inf
    %1038 = vmax.xlane.f32.xlu0 %v1037
    %v1039 = vpop.xlane.xlu0 %1038
    %v1040 = vsel %vm963, %v1030, -inf
    %1041 = vmax.xlane.f32.xlu0 %v1040
    %v1042 = vpop.xlane.xlu0 %1041
    %v1043 = vsel %vm963, %v1031, -inf
    %1044 = vmax.xlane.f32.xlu0 %v1043
    %v1045 = vpop.xlane.xlu0 %1044
    %v1046 = vsel %vm963, %v1032, -inf
    %1047 = vmax.xlane.f32.xlu0 %v1046
    %v1048 = vpop.xlane.xlu0 %1047
    %v1049 = vsel %vm963, %v1033, -inf
    %1050 = vmax.xlane.f32.xlu0 %v1049
    %v1051 = vpop.xlane.xlu0 %1050
    %v1052 = vsel %vm963, %v1034, -inf
    %1053 = vmax.xlane.f32.xlu0 %v1052
    %v1054 = vpop.xlane.xlu0 %1053
    %v1055 = vsel %vm963, %v1035, -inf
    %1056 = vmax.xlane.f32.xlu0 %v1055
    %v1057 = vpop.xlane.xlu0 %1056
    %v1058 = vsel %vm963, %v1036, -inf
    %1059 = vmax.xlane.f32.xlu0 %v1058
    %v1060 = vpop.xlane.xlu0 %1059
    %v1061 = vsub.f32 %v1029, %v1039
    %v1062 = vsub.f32 %v1030, %v1042
    %v1063 = vsub.f32 %v1031, %v1045
    %v1064 = vsub.f32 %v1032, %v1048
    %v1065 = vsub.f32 %v1033, %v1051
    %v1066 = vsub.f32 %v1034, %v1054
    %v1067 = vsub.f32 %v1035, %v1057
    %v1068 = vsub.f32 %v1036, %v1060
    %v1069 = vmul.f32 %v1061, 1.442695
    %v1070 = vpow.pop %v1069
    %v1071 = vmul.f32 %v1062, 1.442695
    %v1072 = vpow.pop %v1071
    %v1073 = vmul.f32 %v1063, 1.442695
    %v1074 = vpow.pop %v1073
    %v1075 = vmul.f32 %v1064, 1.442695
    %v1076 = vpow.pop %v1075
    %v1077 = vmul.f32 %v1065, 1.442695
    %v1078 = vpow.pop %v1077
    %v1079 = vmul.f32 %v1066, 1.442695
    %v1080 = vpow.pop %v1079
    %v1081 = vmul.f32 %v1067, 1.442695
    %v1082 = vpow.pop %v1081
    %v1083 = vmul.f32 %v1068, 1.442695
    %v1084 = vpow.pop %v1083
    %v1085 = vsel %vm963, %v1070, 0.0
    %1086 = vadd.xlane.f32.xlu0 %v1085
    %v1087 = vpop.xlane.xlu0 %1086
    %v1088 = vsel %vm963, %v1072, 0.0
    %1089 = vadd.xlane.f32.xlu0 %v1088
    %v1090 = vpop.xlane.xlu0 %1089
    %v1091 = vsel %vm963, %v1074, 0.0
    %1092 = vadd.xlane.f32.xlu0 %v1091
    %v1093 = vpop.xlane.xlu0 %1092
    %v1094 = vsel %vm963, %v1076, 0.0
    %1095 = vadd.xlane.f32.xlu0 %v1094
    %v1096 = vpop.xlane.xlu0 %1095
    %v1097 = vsel %vm963, %v1078, 0.0
    %1098 = vadd.xlane.f32.xlu0 %v1097
    %v1099 = vpop.xlane.xlu0 %1098
    %v1100 = vsel %vm963, %v1080, 0.0
    %1101 = vadd.xlane.f32.xlu0 %v1100
    %v1102 = vpop.xlane.xlu0 %1101
    %v1103 = vsel %vm963, %v1082, 0.0
    %1104 = vadd.xlane.f32.xlu0 %v1103
    %v1105 = vpop.xlane.xlu0 %1104
    %v1106 = vsel %vm963, %v1084, 0.0
    %1107 = vadd.xlane.f32.xlu0 %v1106
    %v1108 = vpop.xlane.xlu0 %1107
    %v1109 = vrcp.pop %v1087
    %v1110 = vrcp.pop %v1090
    %v1111 = vrcp.pop %v1093
    %v1112 = vrcp.pop %v1096
    %v1113 = vrcp.pop %v1099
    %v1114 = vrcp.pop %v1102
    %v1115 = vrcp.pop %v1105
    %v1116 = vrcp.pop %v1108
    %v1117 = vmul.f32 %v1070, %v1109
    %v1118 = vmul.f32 %v1072, %v1110
    %v1119 = vmul.f32 %v1074, %v1111
    %v1120 = vmul.f32 %v1076, %v1112
    %v1121 = vmul.f32 %v1078, %v1113
    %v1122 = vmul.f32 %v1080, %v1114
    %v1123 = vmul.f32 %v1082, %v1115
    %v1124 = vmul.f32 %v1084, %v1116
    %v1125 = vmax.f32 %v1117, 0.001
    %v1126 = vmax.f32 %v1118, 0.001
    %v1127 = vmax.f32 %v1119, 0.001
    %v1128 = vmax.f32 %v1120, 0.001
    %v1129 = vmax.f32 %v1121, 0.001
    %v1130 = vmax.f32 %v1122, 0.001
    %v1131 = vmax.f32 %v1123, 0.001
    %v1132 = vmax.f32 %v1124, 0.001
    %v1133 = vld [vmem:[%s7] sm:$0x1]
    %v1135 = vlaneseq
    %v1136 = vshrl.u32 %v1135, 7
    %v1137 = vsub.s32 0, %v1136
    %v1138 = vrot.slane %v1133, %v1137
    %v1140 = vmul.f32 %v1125, %v1138
    %v1141 = vmul.f32 %v1126, %v1138
    %v1142 = vmul.f32 %v1127, %v1138
    %v1143 = vmul.f32 %v1128, %v1138
    %v1144 = vmul.f32 %v1129, %v1138
    %v1145 = vmul.f32 %v1130, %v1138
    %v1146 = vmul.f32 %v1131, %v1138
    %v1147 = vmul.f32 %v1132, %v1138
    %v1148 = vsel %vm963, %v1140, 0.0
    %1149 = vadd.xlane.f32.xlu0 %v1148
    %v1150 = vpop.xlane.xlu0 %1149
    %v1151 = vsel %vm963, %v1141, 0.0
    %1152 = vadd.xlane.f32.xlu0 %v1151
    %v1153 = vpop.xlane.xlu0 %1152
    %v1154 = vsel %vm963, %v1142, 0.0
    %1155 = vadd.xlane.f32.xlu0 %v1154
    %v1156 = vpop.xlane.xlu0 %1155
    %v1157 = vsel %vm963, %v1143, 0.0
    %1158 = vadd.xlane.f32.xlu0 %v1157
    %v1159 = vpop.xlane.xlu0 %1158
    %v1160 = vsel %vm963, %v1144, 0.0
    %1161 = vadd.xlane.f32.xlu0 %v1160
    %v1162 = vpop.xlane.xlu0 %1161
    %v1163 = vsel %vm963, %v1145, 0.0
    %1164 = vadd.xlane.f32.xlu0 %v1163
    %v1165 = vpop.xlane.xlu0 %1164
    %v1166 = vsel %vm963, %v1146, 0.0
    %1167 = vadd.xlane.f32.xlu0 %v1166
    %v1168 = vpop.xlane.xlu0 %1167
    %v1169 = vsel %vm963, %v1147, 0.0
    %1170 = vadd.xlane.f32.xlu0 %v1169
    %v1171 = vpop.xlane.xlu0 %1170
    %v1180 = vlaneseq
    %v1181 = vand.u32 %v1180, 127
    %v1182 = vlaneseq
    %v1183 = vshrl.u32 %v1182, 7
    %v1184 = vsub.s32 %v1181, %v1183
    %v1185 = vrot.slane %v1150, %v1184
    %v1186 = vlaneseq
    %v1187 = vshrl.u32 %v1186, 7
    %v1188 = vsub.s32 %v1181, %v1187
    %v1189 = vrot.slane %v1153, %v1188
    %v1190 = vlaneseq
    %v1191 = vshrl.u32 %v1190, 7
    %v1192 = vsub.s32 %v1181, %v1191
    %v1193 = vrot.slane %v1156, %v1192
    %v1194 = vlaneseq
    %v1195 = vshrl.u32 %v1194, 7
    %v1196 = vsub.s32 %v1181, %v1195
    %v1197 = vrot.slane %v1159, %v1196
    %v1198 = vlaneseq
    %v1199 = vshrl.u32 %v1198, 7
    %v1200 = vsub.s32 %v1181, %v1199
    %v1201 = vrot.slane %v1162, %v1200
    %v1202 = vlaneseq
    %v1203 = vshrl.u32 %v1202, 7
    %v1204 = vsub.s32 %v1181, %v1203
    %v1205 = vrot.slane %v1165, %v1204
    %v1206 = vlaneseq
    %v1207 = vshrl.u32 %v1206, 7
    %v1208 = vsub.s32 %v1181, %v1207
    %v1209 = vrot.slane %v1168, %v1208
    %v1210 = vlaneseq
    %v1211 = vshrl.u32 %v1210, 7
    %v1212 = vsub.s32 %v1181, %v1211
    %v1213 = vrot.slane %v1171, %v1212
    %vm1214 = vcmask 1041409
    %v1215 = vsel %vm1214, %v1189, %v1185
    %vm1216 = vcmask 1042434
    %v1217 = vsel %vm1216, %v1193, %v1215
    %vm1218 = vcmask 1043459
    %v1219 = vsel %vm1218, %v1197, %v1217
    %vm1220 = vcmask 1044484
    %v1221 = vsel %vm1220, %v1201, %v1219
    %vm1222 = vcmask 1045509
    %v1223 = vsel %vm1222, %v1205, %v1221
    %vm1224 = vcmask 1046534
    %v1225 = vsel %vm1224, %v1209, %v1223
    %vm1226 = vcmask 1047559
    %v1227 = vsel %vm1226, %v1213, %v1225
    %vm1229 = vcmask 31744
    %1230 = vst.msk [vmem:[%s8] sm:$0xff] %vm1229, %v1227
    // Predicated region
    $region50: #{tpu_custom_call.1} parent=1 // pred_check
      _
    $region51: #{tpu_custom_call.1} parent=1 // pred_check_branch
      %1232 = sbr.rel (0) target = $region53
    $region52: #{tpu_custom_call.1} parent=1 // pred_region
      _
    $region53: #{tpu_custom_call.1} parent=1 // pred_fallthru
      _
    // Predicated region
    $region54: #{tpu_custom_call.1} parent=1 // pred_check
      _
    $region55: #{tpu_custom_call.1} parent=1 // pred_check_branch
      %1234 = sbr.rel (0) target = $region57
    $region56: #{tpu_custom_call.1} parent=1 // pred_region
      _
    $region57: #{tpu_custom_call.1} parent=1 // pred_fallthru
      _
    %1235 = vsyncpa [#allocation3], 1
    %1236 = vsyncpa [#allocation5], 1
    %1237 = vsyncpa [#allocation8], 1

</llo_original>
